<compile_context>
chip_gen: v5e
topology: v5e:2x2
jax: 0.10.0
libtpu: 0.0.40
codegen_flags: <defaults>
</compile_context>

<pallas_src>
import jax
import jax.numpy as jnp
from jax import lax
from jax.experimental import pallas as pl
from jax.experimental.pallas import tpu as pltpu


def _fusion_head_kernel(text_ref, img_ref, wt_ref, wi_ref, b_ref, out_ref):
    """Single-shot fusion head: logits = text@Wt.T + img@Wi.T + b.

    All refs are whole-array VMEM blocks (no grid):
      text_ref: (B, Ht)   img_ref: (B, Hi)          (producer dtype, e.g. f32)
      wt_ref:   (C, Ht)   wi_ref:  (C, Hi)          (bf16, lane-dense on K)
      b_ref:    (1, C)    out_ref: (B, C)
    Contraction is on the LAST dim of both operands (NT form), so the
    lane-dense (C, K) weight layout feeds the MXU with no transpose.
    """
    cdtype = wt_ref.dtype
    nt = (((1,), (1,)), ((), ()))  # contract last dims, no batch dims
    logits = lax.dot_general(
        text_ref[...].astype(cdtype), wt_ref[...],
        dimension_numbers=nt, preferred_element_type=jnp.float32)
    logits = logits + lax.dot_general(
        img_ref[...].astype(cdtype), wi_ref[...],
        dimension_numbers=nt, preferred_element_type=jnp.float32)
    out_ref[...] = (logits + b_ref[...]).astype(out_ref.dtype)


def prepare_fc_params(w, b, h_text, weight_dtype=jnp.bfloat16):
    """One-time (parameter-load-time) prep of nn.Linear(H_text+2048, C) params.

    w: (C, H_text + 2048) in PyTorch nn.Linear layout, b: (C,).
    Keeps the (C, K) layout (K last => lane-dense, contiguous DMA) and casts
    the weights to bf16; bias stays f32 since it adds into the f32 accumulator.
    """
    w_text = w[:, :h_text].astype(weight_dtype)     # (C, Ht)
    w_img = w[:, h_text:].astype(weight_dtype)      # (C, Hi)
    b2d = b.reshape(1, -1).astype(jnp.float32)      # (1, C)
    return w_text, w_img, b2d


def multimodal_fusion_head(text_feat, img_feat, w_text, w_img, b2d):
    """text_feat: (B, Ht)  img_feat: (B, Hi)
       w_text: (C, Ht)  w_img: (C, Hi)  b2d: (1, C)   -> logits (B, C)
    """
    B, Ht = text_feat.shape
    _, Hi = img_feat.shape
    C = w_text.shape[0]

    ftb = text_feat.dtype.itemsize
    fib = img_feat.dtype.itemsize
    wb = w_text.dtype.itemsize
    flops = 2 * B * (Ht + Hi) * C
    bytes_accessed = (B * Ht * ftb + B * Hi * fib
                      + C * Ht * wb + C * Hi * wb
                      + C * 4 + B * C * text_feat.dtype.itemsize)

    vmem = pl.BlockSpec(memory_space=pltpu.MemorySpace.VMEM)
    return pl.pallas_call(
        _fusion_head_kernel,
        out_shape=jax.ShapeDtypeStruct((B, C), text_feat.dtype),
        in_specs=[vmem, vmem, vmem, vmem, vmem],
        out_specs=vmem,
        cost_estimate=pl.CostEstimate(
            flops=flops, transcendentals=0, bytes_accessed=bytes_accessed),
    )(text_feat, img_feat, w_text, w_img, b2d)


@jax.jit
def multimodal_classifier_forward(text_feat, img_feat, w_text, w_img, b2d):
    return multimodal_fusion_head(text_feat, img_feat, w_text, w_img, b2d)


if __name__ == "__main__":
    # Small, deterministic shapes consistent with the module:
    #   bert hidden = 32 (small stand-in), inception feature = 2048 (fixed by
    #   the module's "+ 2048"), num_classes = 8.  Batch = 8: rows 3..8 ride
    #   along in the sublane padding, so this amortizes launch overhead for
    #   free.
    B, H_TEXT, H_IMG, NUM_CLASSES = 8, 32, 2048, 8

    key = jax.random.PRNGKey(0)
    k_txt, k_img, k_w, k_b = jax.random.split(key, 4)

    # Stand-ins for bert(**text_input).pooler_output and
    # inception(image_input).flatten(1)
    text_feat = jax.random.normal(k_txt, (B, H_TEXT), dtype=jnp.float32)
    img_feat = jax.random.normal(k_img, (B, H_IMG), dtype=jnp.float32)

    # nn.Linear(H_TEXT + 2048, NUM_CLASSES) parameters, deterministic init
    fan_in = H_TEXT + H_IMG
    bound = 1.0 / (fan_in ** 0.5)
    w = jax.random.uniform(k_w, (NUM_CLASSES, fan_in),
                           minval=-bound, maxval=bound, dtype=jnp.float32)
    b = jax.random.uniform(k_b, (NUM_CLASSES,),
                           minval=-bound, maxval=bound, dtype=jnp.float32)

    # One-time parameter prep (load time), not per-forward work.
    w_text, w_img, b2d = prepare_fc_params(w, b, H_TEXT)
    w_text, w_img, b2d = jax.block_until_ready((w_text, w_img, b2d))

    out = multimodal_classifier_forward(text_feat, img_feat, w_text, w_img, b2d)
    out = jax.block_until_ready(out)

    # Reference: exact PyTorch semantics (concat then Linear) in f32.
    # Kernel multiplies in bf16 (f32 accumulation), so tolerance is loosened.
    ref = jnp.concatenate([text_feat, img_feat], axis=1) @ w.T + b
    assert out.shape == (B, NUM_CLASSES)
    assert jnp.allclose(out, ref, atol=3e-2, rtol=3e-2)

    print("KERNEL_OK")
</pallas_src>

<mosaic_0001>
module attributes {stable_mosaic.version = 11 : i64} {
  func.func @_fusion_head_kernel(%arg0: memref<8x32xf32, #tpu.memory_space<vmem>>, %arg1: memref<8x2048xf32, #tpu.memory_space<vmem>>, %arg2: memref<8x32xbf16, #tpu.memory_space<vmem>>, %arg3: memref<8x2048xbf16, #tpu.memory_space<vmem>>, %arg4: memref<1x8xf32, #tpu.memory_space<vmem>>, %arg5: memref<8x8xf32, #tpu.memory_space<vmem>>) attributes {dimension_semantics = [], scalar_prefetch = 0 : i64, scratch_operands = 0 : i64, tpu.core_type = #tpu.core_type<tc>} {
    %c0 = arith.constant 0 : index
    %c0_0 = arith.constant 0 : index
    %0 = vector.load %arg0[%c0, %c0_0] : memref<8x32xf32, #tpu.memory_space<vmem>>, vector<8x32xf32>
    %1 = arith.truncf %0 : vector<8x32xf32> to vector<8x32xbf16>
    %c0_1 = arith.constant 0 : index
    %c0_2 = arith.constant 0 : index
    %2 = vector.load %arg2[%c0_1, %c0_2] : memref<8x32xbf16, #tpu.memory_space<vmem>>, vector<8x32xbf16>
    %cst = arith.constant dense<0.000000e+00> : vector<8x8xf32>
    %3 = tpu.matmul %1, %2, %cst {dimension_numbers = #tpu.dot_dimension_numbers<[1], [1], [0], [0], [0, 0, 1, 0], [], []>} : vector<8x32xbf16>, vector<8x32xbf16>, vector<8x8xf32> -> vector<8x8xf32>
    %c0_3 = arith.constant 0 : index
    %c0_4 = arith.constant 0 : index
    %4 = vector.load %arg1[%c0_3, %c0_4] : memref<8x2048xf32, #tpu.memory_space<vmem>>, vector<8x2048xf32>
    %5 = arith.truncf %4 : vector<8x2048xf32> to vector<8x2048xbf16>
    %c0_5 = arith.constant 0 : index
    %c0_6 = arith.constant 0 : index
    %6 = vector.load %arg3[%c0_5, %c0_6] : memref<8x2048xbf16, #tpu.memory_space<vmem>>, vector<8x2048xbf16>
    %cst_7 = arith.constant dense<0.000000e+00> : vector<8x8xf32>
    %7 = tpu.matmul %5, %6, %cst_7 {dimension_numbers = #tpu.dot_dimension_numbers<[1], [1], [0], [0], [0, 0, 1, 0], [], []>} : vector<8x2048xbf16>, vector<8x2048xbf16>, vector<8x8xf32> -> vector<8x8xf32>
    %8 = arith.addf %3, %7 : vector<8x8xf32>
    %c0_8 = arith.constant 0 : index
    %c0_9 = arith.constant 0 : index
    %9 = vector.load %arg4[%c0_8, %c0_9] : memref<1x8xf32, #tpu.memory_space<vmem>>, vector<1x8xf32>
    %10 = vector.broadcast %9 : vector<1x8xf32> to vector<8x8xf32>
    %11 = arith.addf %8, %10 : vector<8x8xf32>
    %c0_10 = arith.constant 0 : index
    %c0_11 = arith.constant 0 : index
    %12 = vector.load %arg5[%c0_10, %c0_11] : memref<8x8xf32, #tpu.memory_space<vmem>>, vector<8x8xf32>
    tpu.vector_store %arg5[%c0_10, %c0_11], %11 {strides = array<i32>} : memref<8x8xf32, #tpu.memory_space<vmem>>, vector<8x8xf32>,
    return
  }
}

</mosaic_0001>

<llo_original>
// kernel: multimodal_classifier_forward.1
$region0: #{multimodal_classifier_forward.1}
  #allocation0 [shape = 'u32[]', space=smem, size = 0x4, offset = 0x4, fixed_abs, tag = 'smem constant byte address 0x4 - core index']
  #allocation1 [shape = 'u32[72,128]{1,0:T(1,128)}', space=vmem, size = 0x9000, scoped, tag = 'internal scratch']
  %s0 = inlined_call_operand.hbm [shape: f32[8,32], index: 0, kind: input, shape index: {}]
  %s1 = inlined_call_operand.hbm [shape: f32[8,2048], index: 1, kind: input, shape index: {}]
  %s2 = inlined_call_operand.hbm [shape: bf16[8,32], index: 2, kind: input, shape index: {}]
  %s3 = inlined_call_operand.hbm [shape: bf16[8,2048], index: 3, kind: input, shape index: {}]
  %s4 = inlined_call_operand.vmem [shape: f32[1,8], index: 4, kind: input, shape index: {}]
  %s5 = inlined_call_operand.hbm [shape: f32[8,8], index: 5, kind: output, shape index: {}]
  %s6 = sld [smem:[#allocation0]]
  $region46: #{multimodal_classifier_forward.1} parent=0
    _
  %s8 = ssub.s32 1, %s6
  %s9 = scalar_select 0, %s8, %s6
  $region1: #{multimodal_classifier_forward.1} parent=0
    #allocation2 [shape = 'u8[4096]{0}', space=vmem, size = 0x1000, scoped, tag = 'input window, operand 0, single buffered']
    #allocation3 [shape = 's32[1]{0}', space=sflag, size = 0x4, scoped, tag = 'scoped memory for multimodal_classifier_forward.1']
    #allocation4 [shape = 's32[1]{0}', space=sflag, size = 0x4, scoped, tag = 'scoped memory for multimodal_classifier_forward.1']
    #allocation5 [shape = 'u8[65536]{0}', space=vmem, size = 0x10000, scoped, tag = 'input window, operand 1, single buffered']
    #allocation6 [shape = 's32[1]{0}', space=sflag, size = 0x4, scoped, tag = 'scoped memory for multimodal_classifier_forward.1']
    #allocation7 [shape = 'u8[2048]{0}', space=vmem, size = 0x800, scoped, tag = 'input window, operand 2, single buffered']
    #allocation8 [shape = 'u8[32768]{0}', space=vmem, size = 0x8000, scoped, tag = 'input window, operand 3, single buffered']
    #allocation9 [shape = 's32[1]{0}', space=sflag, size = 0x4, scoped, tag = 'scoped memory for multimodal_classifier_forward.1']
    #allocation10 [shape = 'u8[4096]{0}', space=vmem, size = 0x1000, scoped, tag = 'output window, operand 0, single buffered']
    %10 = vsyncpa [#allocation3], 0
    %11 = vsyncpa [#allocation6], 0
    %12 = vsyncpa [#allocation9], 0
    %13 = vsyncpa [#allocation4], 0
    // Predicated region
    $region2: #{multimodal_classifier_forward.1} parent=1 // pred_check
      _
    $region3: #{multimodal_classifier_forward.1} parent=1 // pred_check_branch
      %15 = sbr.rel (0) target = $region5
    $region4: #{multimodal_classifier_forward.1} parent=1 // pred_region
      %17 = vsyncadd [#allocation3], 0
      %s19 = sshll.u32 %s0, 4
      %s20 = int_to_ptr.hbm [resolvable:$true] %s19
      %s21 = sshll.u32 [#allocation2], 4
      %s22 = int_to_ptr.vmem [resolvable:$true] %s21
      %24 = dma.hbm_to_vmem [thread:$0]  %s20, 128, %s22, [#allocation3]
    $region5: #{multimodal_classifier_forward.1} parent=1 // pred_fallthru
      _
    // Predicated region
    $region6: #{multimodal_classifier_forward.1} parent=1 // pred_check
      _
    $region7: #{multimodal_classifier_forward.1} parent=1 // pred_check_branch
      %26 = sbr.rel (0) target = $region9
    $region8: #{multimodal_classifier_forward.1} parent=1 // pred_region
      %28 = vsyncadd [#allocation6], 0
      %s30 = sshll.u32 %s1, 4
      %s31 = int_to_ptr.hbm [resolvable:$true] %s30
      %s32 = sshll.u32 [#allocation5], 4
      %s33 = int_to_ptr.vmem [resolvable:$true] %s32
      %35 = dma.hbm_to_vmem [thread:$0]  %s31, 2048, %s33, [#allocation6]
    $region9: #{multimodal_classifier_forward.1} parent=1 // pred_fallthru
      _
    // Predicated region
    $region10: #{multimodal_classifier_forward.1} parent=1 // pred_check
      _
    $region11: #{multimodal_classifier_forward.1} parent=1 // pred_check_branch
      %37 = sbr.rel (0) target = $region13
    $region12: #{multimodal_classifier_forward.1} parent=1 // pred_region
      %39 = vsyncadd [#allocation6], 0
      %s41 = sshll.u32 %s2, 4
      %s42 = int_to_ptr.hbm [resolvable:$true] %s41
      %s43 = sshll.u32 [#allocation7], 4
      %s44 = int_to_ptr.vmem [resolvable:$true] %s43
      %46 = dma.hbm_to_vmem [thread:$0]  %s42, 64, %s44, [#allocation6]
    $region13: #{multimodal_classifier_forward.1} parent=1 // pred_fallthru
      _
    // Predicated region
    $region14: #{multimodal_classifier_forward.1} parent=1 // pred_check
      _
    $region15: #{multimodal_classifier_forward.1} parent=1 // pred_check_branch
      %48 = sbr.rel (0) target = $region17
    $region16: #{multimodal_classifier_forward.1} parent=1 // pred_region
      %50 = vsyncadd [#allocation9], 0
      %s52 = sshll.u32 %s3, 4
      %s53 = int_to_ptr.hbm [resolvable:$true] %s52
      %s54 = sshll.u32 [#allocation8], 4
      %s55 = int_to_ptr.vmem [resolvable:$true] %s54
      %57 = dma.hbm_to_vmem [thread:$0]  %s53, 1024, %s55, [#allocation9]
    $region17: #{multimodal_classifier_forward.1} parent=1 // pred_fallthru
      _
    // Predicated region
    $region18: #{multimodal_classifier_forward.1} parent=1 // pred_check
      _
    $region19: #{multimodal_classifier_forward.1} parent=1 // pred_check_branch
      %59 = sbr.rel (0) target = $region21
    $region20: #{multimodal_classifier_forward.1} parent=1 // pred_region
      _
    $region21: #{multimodal_classifier_forward.1} parent=1 // pred_fallthru
      _
    // Predicated region
    $region22: #{multimodal_classifier_forward.1} parent=1 // pred_check
      _
    $region23: #{multimodal_classifier_forward.1} parent=1 // pred_check_branch
      %61 = sbr.rel (0) target = $region25
    $region24: #{multimodal_classifier_forward.1} parent=1 // pred_region
      %63 = dma.done [#allocation3], 128
    $region25: #{multimodal_classifier_forward.1} parent=1 // pred_fallthru
      _
    // Predicated region
    $region26: #{multimodal_classifier_forward.1} parent=1 // pred_check
      _
    $region27: #{multimodal_classifier_forward.1} parent=1 // pred_check_branch
      %65 = sbr.rel (0) target = $region29
    $region28: #{multimodal_classifier_forward.1} parent=1 // pred_region
      %67 = dma.done [#allocation6], 2048
    $region29: #{multimodal_classifier_forward.1} parent=1 // pred_fallthru
      _
    // Predicated region
    $region30: #{multimodal_classifier_forward.1} parent=1 // pred_check
      _
    $region31: #{multimodal_classifier_forward.1} parent=1 // pred_check_branch
      %69 = sbr.rel (0) target = $region33
    $region32: #{multimodal_classifier_forward.1} parent=1 // pred_region
      %71 = dma.done [#allocation6], 64
    $region33: #{multimodal_classifier_forward.1} parent=1 // pred_fallthru
      _
    // Predicated region
    $region34: #{multimodal_classifier_forward.1} parent=1 // pred_check
      _
    $region35: #{multimodal_classifier_forward.1} parent=1 // pred_check_branch
      %73 = sbr.rel (0) target = $region37
    $region36: #{multimodal_classifier_forward.1} parent=1 // pred_region
      %75 = dma.done [#allocation9], 1024
    $region37: #{multimodal_classifier_forward.1} parent=1 // pred_fallthru
      _
    %v77 = vld [vmem:[#allocation2] sm:$0xff]
    %v78 = vpack.c.bf16 %v77, %v77
    %v79 = vld [vmem:[#allocation7] sm:$0xf]
    %v80 = vld [vmem:[#allocation5] sm:$0xff]
    %v81 = vld [vmem:[#allocation5 + $0x8] sm:$0xff]
    %v82 = vld [vmem:[#allocation5 + $0x10] sm:$0xff]
    %v83 = vld [vmem:[#allocation5 + $0x18] sm:$0xff]
    %v84 = vld [vmem:[#allocation5 + $0x20] sm:$0xff]
    %v85 = vld [vmem:[#allocation5 + $0x28] sm:$0xff]
    %v86 = vld [vmem:[#allocation5 + $0x30] sm:$0xff]
    %v87 = vld [vmem:[#allocation5 + $0x38] sm:$0xff]
    %v88 = vld [vmem:[#allocation5 + $0x40] sm:$0xff]
    %v89 = vld [vmem:[#allocation5 + $0x48] sm:$0xff]
    %v90 = vld [vmem:[#allocation5 + $0x50] sm:$0xff]
    %v91 = vld [vmem:[#allocation5 + $0x58] sm:$0xff]
    %v92 = vld [vmem:[#allocation5 + $0x60] sm:$0xff]
    %v93 = vld [vmem:[#allocation5 + $0x68] sm:$0xff]
    %v94 = vld [vmem:[#allocation5 + $0x70] sm:$0xff]
    %v95 = vld [vmem:[#allocation5 + $0x78] sm:$0xff]
    %v96 = vpack.c.bf16 %v80, %v80
    %v97 = vpack.c.bf16 %v81, %v81
    %v98 = vpack.c.bf16 %v82, %v82
    %v99 = vpack.c.bf16 %v83, %v83
    %v100 = vpack.c.bf16 %v84, %v84
    %v101 = vpack.c.bf16 %v85, %v85
    %v102 = vpack.c.bf16 %v86, %v86
    %v103 = vpack.c.bf16 %v87, %v87
    %v104 = vpack.c.bf16 %v88, %v88
    %v105 = vpack.c.bf16 %v89, %v89
    %v106 = vpack.c.bf16 %v90, %v90
    %v107 = vpack.c.bf16 %v91, %v91
    %v108 = vpack.c.bf16 %v92, %v92
    %v109 = vpack.c.bf16 %v93, %v93
    %v110 = vpack.c.bf16 %v94, %v94
    %v111 = vpack.c.bf16 %v95, %v95
    %v112 = vld [vmem:[#allocation8] sm:$0xff]
    %v113 = vld [vmem:[#allocation8 + $0x8] sm:$0xff]
    %v114 = vld [vmem:[#allocation8 + $0x10] sm:$0xff]
    %v115 = vld [vmem:[#allocation8 + $0x18] sm:$0xff]
    %v116 = vld [vmem:[#allocation8 + $0x20] sm:$0xff]
    %v117 = vld [vmem:[#allocation8 + $0x28] sm:$0xff]
    %v118 = vld [vmem:[#allocation8 + $0x30] sm:$0xff]
    %v119 = vld [vmem:[#allocation8 + $0x38] sm:$0xff]
    %v128 = vunpack.c.l.b16 %v112
    %v129 = vunpack.c.h.b16 %v112
    %v130 = vunpack.c.l.b16 %v113
    %v131 = vunpack.c.h.b16 %v113
    %v132 = vunpack.c.l.b16 %v114
    %v133 = vunpack.c.h.b16 %v114
    %v134 = vunpack.c.l.b16 %v115
    %v135 = vunpack.c.h.b16 %v115
    %v136 = vunpack.c.l.b16 %v116
    %v137 = vunpack.c.h.b16 %v116
    %v138 = vunpack.c.l.b16 %v117
    %v139 = vunpack.c.h.b16 %v117
    %v140 = vunpack.c.l.b16 %v118
    %v141 = vunpack.c.h.b16 %v118
    %v142 = vunpack.c.l.b16 %v119
    %v143 = vunpack.c.h.b16 %v119
    %v144 = vpack.c.b16 %v128, %v128
    %v145 = vpack.c.b16 %v129, %v129
    %v146 = vpack.c.b16 %v130, %v130
    %v147 = vpack.c.b16 %v131, %v131
    %v148 = vpack.c.b16 %v132, %v132
    %v149 = vpack.c.b16 %v133, %v133
    %v150 = vpack.c.b16 %v134, %v134
    %v151 = vpack.c.b16 %v135, %v135
    %v152 = vpack.c.b16 %v136, %v136
    %v153 = vpack.c.b16 %v137, %v137
    %v154 = vpack.c.b16 %v138, %v138
    %v155 = vpack.c.b16 %v139, %v139
    %v156 = vpack.c.b16 %v140, %v140
    %v157 = vpack.c.b16 %v141, %v141
    %v158 = vpack.c.b16 %v142, %v142
    %v159 = vpack.c.b16 %v143, %v143
    %176 = vmatpush.bf16.xpose.msra.mxu0 0
    %177 = vmatpush.bf16.xpose.msra.mxu0 0
    %178 = vmatpush.bf16.xpose.msra.mxu0 0
    %179 = vmatpush.bf16.xpose.msra.mxu0 0
    %180 = vmatpush.bf16.xpose.msra.mxu0 0
    %181 = vmatpush.bf16.xpose.msra.mxu0 0
    %182 = vmatpush.bf16.xpose.msra.mxu0 0
    %183 = vmatpush.bf16.xpose.msra.mxu0 %v144
    %184 = vmatmul.bf16.gmra.mxu0 %v96
    %v185 = vpop.f32.mrf.mxu0
    %v186 = vadd.f32 0.0, %v185
    %v187 = vpop.f32.mrf.mxu0
    %188 = vdwg.mxu0
    %189 = vmatpush.bf16.xpose.msra.mxu0 0
    %190 = vmatpush.bf16.xpose.msra.mxu0 0
    %191 = vmatpush.bf16.xpose.msra.mxu0 0
    %192 = vmatpush.bf16.xpose.msra.mxu0 0
    %193 = vmatpush.bf16.xpose.msra.mxu0 0
    %194 = vmatpush.bf16.xpose.msra.mxu0 0
    %195 = vmatpush.bf16.xpose.msra.mxu0 0
    %196 = vmatpush.bf16.xpose.msra.mxu0 %v145
    %197 = vmatmul.bf16.gmra.mxu0 %v97
    %v198 = vpop.f32.mrf.mxu0
    %v199 = vadd.f32 %v186, %v198
    %v200 = vpop.f32.mrf.mxu0
    %201 = vdwg.mxu0
    %202 = vmatpush.bf16.xpose.msra.mxu0 0
    %203 = vmatpush.bf16.xpose.msra.mxu0 0
    %204 = vmatpush.bf16.xpose.msra.mxu0 0
    %205 = vmatpush.bf16.xpose.msra.mxu0 0
    %206 = vmatpush.bf16.xpose.msra.mxu0 0
    %207 = vmatpush.bf16.xpose.msra.mxu0 0
    %208 = vmatpush.bf16.xpose.msra.mxu0 0
    %209 = vmatpush.bf16.xpose.msra.mxu0 %v146
    %210 = vmatmul.bf16.gmra.mxu0 %v98
    %v211 = vpop.f32.mrf.mxu0
    %v212 = vadd.f32 %v199, %v211
    %v213 = vpop.f32.mrf.mxu0
    %214 = vdwg.mxu0
    %215 = vmatpush.bf16.xpose.msra.mxu0 0
    %216 = vmatpush.bf16.xpose.msra.mxu0 0
    %217 = vmatpush.bf16.xpose.msra.mxu0 0
    %218 = vmatpush.bf16.xpose.msra.mxu0 0
    %219 = vmatpush.bf16.xpose.msra.mxu0 0
    %220 = vmatpush.bf16.xpose.msra.mxu0 0
    %221 = vmatpush.bf16.xpose.msra.mxu0 0
    %222 = vmatpush.bf16.xpose.msra.mxu0 %v147
    %223 = vmatmul.bf16.gmra.mxu0 %v99
    %v224 = vpop.f32.mrf.mxu0
    %v225 = vadd.f32 %v212, %v224
    %v226 = vpop.f32.mrf.mxu0
    %227 = vdwg.mxu0
    %228 = vmatpush.bf16.xpose.msra.mxu0 0
    %229 = vmatpush.bf16.xpose.msra.mxu0 0
    %230 = vmatpush.bf16.xpose.msra.mxu0 0
    %231 = vmatpush.bf16.xpose.msra.mxu0 0
    %232 = vmatpush.bf16.xpose.msra.mxu0 0
    %233 = vmatpush.bf16.xpose.msra.mxu0 0
    %234 = vmatpush.bf16.xpose.msra.mxu0 0
    %235 = vmatpush.bf16.xpose.msra.mxu0 %v148
    %236 = vmatmul.bf16.gmra.mxu0 %v100
    %v237 = vpop.f32.mrf.mxu0
    %v238 = vadd.f32 %v225, %v237
    %v239 = vpop.f32.mrf.mxu0
    %240 = vdwg.mxu0
    %241 = vmatpush.bf16.xpose.msra.mxu0 0
    %242 = vmatpush.bf16.xpose.msra.mxu0 0
    %243 = vmatpush.bf16.xpose.msra.mxu0 0
    %244 = vmatpush.bf16.xpose.msra.mxu0 0
    %245 = vmatpush.bf16.xpose.msra.mxu0 0
    %246 = vmatpush.bf16.xpose.msra.mxu0 0
    %247 = vmatpush.bf16.xpose.msra.mxu0 0
    %248 = vmatpush.bf16.xpose.msra.mxu0 %v149
    %249 = vmatmul.bf16.gmra.mxu0 %v101
    %v250 = vpop.f32.mrf.mxu0
    %v251 = vadd.f32 %v238, %v250
    %v252 = vpop.f32.mrf.mxu0
    %253 = vdwg.mxu0
    %254 = vmatpush.bf16.xpose.msra.mxu0 0
    %255 = vmatpush.bf16.xpose.msra.mxu0 0
    %256 = vmatpush.bf16.xpose.msra.mxu0 0
    %257 = vmatpush.bf16.xpose.msra.mxu0 0
    %258 = vmatpush.bf16.xpose.msra.mxu0 0
    %259 = vmatpush.bf16.xpose.msra.mxu0 0
    %260 = vmatpush.bf16.xpose.msra.mxu0 0
    %261 = vmatpush.bf16.xpose.msra.mxu0 %v150
    %262 = vmatmul.bf16.gmra.mxu0 %v102
    %v263 = vpop.f32.mrf.mxu0
    %v264 = vadd.f32 %v251, %v263
    %v265 = vpop.f32.mrf.mxu0
    %266 = vdwg.mxu0
    %267 = vmatpush.bf16.xpose.msra.mxu0 0
    %268 = vmatpush.bf16.xpose.msra.mxu0 0
    %269 = vmatpush.bf16.xpose.msra.mxu0 0
    %270 = vmatpush.bf16.xpose.msra.mxu0 0
    %271 = vmatpush.bf16.xpose.msra.mxu0 0
    %272 = vmatpush.bf16.xpose.msra.mxu0 0
    %273 = vmatpush.bf16.xpose.msra.mxu0 0
    %274 = vmatpush.bf16.xpose.msra.mxu0 %v151
    %275 = vmatmul.bf16.gmra.mxu0 %v103
    %v276 = vpop.f32.mrf.mxu0
    %v277 = vadd.f32 %v264, %v276
    %v278 = vpop.f32.mrf.mxu0
    %279 = vdwg.mxu0
    %280 = vmatpush.bf16.xpose.msra.mxu0 0
    %281 = vmatpush.bf16.xpose.msra.mxu0 0
    %282 = vmatpush.bf16.xpose.msra.mxu0 0
    %283 = vmatpush.bf16.xpose.msra.mxu0 0
    %284 = vmatpush.bf16.xpose.msra.mxu0 0
    %285 = vmatpush.bf16.xpose.msra.mxu0 0
    %286 = vmatpush.bf16.xpose.msra.mxu0 0
    %287 = vmatpush.bf16.xpose.msra.mxu0 %v152
    %288 = vmatmul.bf16.gmra.mxu0 %v104
    %v289 = vpop.f32.mrf.mxu0
    %v290 = vadd.f32 %v277, %v289
    %v291 = vpop.f32.mrf.mxu0
    %292 = vdwg.mxu0
    %293 = vmatpush.bf16.xpose.msra.mxu0 0
    %294 = vmatpush.bf16.xpose.msra.mxu0 0
    %295 = vmatpush.bf16.xpose.msra.mxu0 0
    %296 = vmatpush.bf16.xpose.msra.mxu0 0
    %297 = vmatpush.bf16.xpose.msra.mxu0 0
    %298 = vmatpush.bf16.xpose.msra.mxu0 0
    %299 = vmatpush.bf16.xpose.msra.mxu0 0
    %300 = vmatpush.bf16.xpose.msra.mxu0 %v153
    %301 = vmatmul.bf16.gmra.mxu0 %v105
    %v302 = vpop.f32.mrf.mxu0
    %v303 = vadd.f32 %v290, %v302
    %v304 = vpop.f32.mrf.mxu0
    %305 = vdwg.mxu0
    %306 = vmatpush.bf16.xpose.msra.mxu0 0
    %307 = vmatpush.bf16.xpose.msra.mxu0 0
    %308 = vmatpush.bf16.xpose.msra.mxu0 0
    %309 = vmatpush.bf16.xpose.msra.mxu0 0
    %310 = vmatpush.bf16.xpose.msra.mxu0 0
    %311 = vmatpush.bf16.xpose.msra.mxu0 0
    %312 = vmatpush.bf16.xpose.msra.mxu0 0
    %313 = vmatpush.bf16.xpose.msra.mxu0 %v154
    %314 = vmatmul.bf16.gmra.mxu0 %v106
    %v315 = vpop.f32.mrf.mxu0
    %v316 = vadd.f32 %v303, %v315
    %v317 = vpop.f32.mrf.mxu0
    %318 = vdwg.mxu0
    %319 = vmatpush.bf16.xpose.msra.mxu0 0
    %320 = vmatpush.bf16.xpose.msra.mxu0 0
    %321 = vmatpush.bf16.xpose.msra.mxu0 0
    %322 = vmatpush.bf16.xpose.msra.mxu0 0
    %323 = vmatpush.bf16.xpose.msra.mxu0 0
    %324 = vmatpush.bf16.xpose.msra.mxu0 0
    %325 = vmatpush.bf16.xpose.msra.mxu0 0
    %326 = vmatpush.bf16.xpose.msra.mxu0 %v155
    %327 = vmatmul.bf16.gmra.mxu0 %v107
    %v328 = vpop.f32.mrf.mxu0
    %v329 = vadd.f32 %v316, %v328
    %v330 = vpop.f32.mrf.mxu0
    %331 = vdwg.mxu0
    %332 = vmatpush.bf16.xpose.msra.mxu0 0
    %333 = vmatpush.bf16.xpose.msra.mxu0 0
    %334 = vmatpush.bf16.xpose.msra.mxu0 0
    %335 = vmatpush.bf16.xpose.msra.mxu0 0
    %336 = vmatpush.bf16.xpose.msra.mxu0 0
    %337 = vmatpush.bf16.xpose.msra.mxu0 0
    %338 = vmatpush.bf16.xpose.msra.mxu0 0
    %339 = vmatpush.bf16.xpose.msra.mxu0 %v156
    %340 = vmatmul.bf16.gmra.mxu0 %v108
    %v341 = vpop.f32.mrf.mxu0
    %v342 = vadd.f32 %v329, %v341
    %v343 = vpop.f32.mrf.mxu0
    %344 = vdwg.mxu0
    %345 = vmatpush.bf16.xpose.msra.mxu0 0
    %346 = vmatpush.bf16.xpose.msra.mxu0 0
    %347 = vmatpush.bf16.xpose.msra.mxu0 0
    %348 = vmatpush.bf16.xpose.msra.mxu0 0
    %349 = vmatpush.bf16.xpose.msra.mxu0 0
    %350 = vmatpush.bf16.xpose.msra.mxu0 0
    %351 = vmatpush.bf16.xpose.msra.mxu0 0
    %352 = vmatpush.bf16.xpose.msra.mxu0 %v157
    %353 = vmatmul.bf16.gmra.mxu0 %v109
    %v354 = vpop.f32.mrf.mxu0
    %v355 = vadd.f32 %v342, %v354
    %v356 = vpop.f32.mrf.mxu0
    %357 = vdwg.mxu0
    %358 = vmatpush.bf16.xpose.msra.mxu0 0
    %359 = vmatpush.bf16.xpose.msra.mxu0 0
    %360 = vmatpush.bf16.xpose.msra.mxu0 0
    %361 = vmatpush.bf16.xpose.msra.mxu0 0
    %362 = vmatpush.bf16.xpose.msra.mxu0 0
    %363 = vmatpush.bf16.xpose.msra.mxu0 0
    %364 = vmatpush.bf16.xpose.msra.mxu0 0
    %365 = vmatpush.bf16.xpose.msra.mxu0 %v158
    %366 = vmatmul.bf16.gmra.mxu0 %v110
    %v367 = vpop.f32.mrf.mxu0
    %v368 = vadd.f32 %v355, %v367
    %v369 = vpop.f32.mrf.mxu0
    %370 = vdwg.mxu0
    %371 = vmatpush.bf16.xpose.msra.mxu0 0
    %372 = vmatpush.bf16.xpose.msra.mxu0 0
    %373 = vmatpush.bf16.xpose.msra.mxu0 0
    %374 = vmatpush.bf16.xpose.msra.mxu0 0
    %375 = vmatpush.bf16.xpose.msra.mxu0 0
    %376 = vmatpush.bf16.xpose.msra.mxu0 0
    %377 = vmatpush.bf16.xpose.msra.mxu0 0
    %378 = vmatpush.bf16.xpose.msra.mxu0 %v159
    %379 = vmatmul.bf16.gmra.mxu0 %v111
    %v380 = vpop.f32.mrf.mxu0
    %v381 = vadd.f32 %v368, %v380
    %v382 = vpop.f32.mrf.mxu0
    %383 = vdwg.mxu0
    %vm384 = vcmask 261120
    %v386 = vsel %vm384, %v78, 0
    %v389 = vsel %vm384, %v79, 0
    %391 = vmatpush.bf16.xpose.msra.mxu0 0
    %392 = vmatpush.bf16.xpose.msra.mxu0 0
    %393 = vmatpush.bf16.xpose.msra.mxu0 0
    %394 = vmatpush.bf16.xpose.msra.mxu0 0
    %395 = vmatpush.bf16.xpose.msra.mxu0 0
    %396 = vmatpush.bf16.xpose.msra.mxu0 0
    %397 = vmatpush.bf16.xpose.msra.mxu0 0
    %398 = vmatpush.bf16.xpose.msra.mxu0 %v389
    %399 = vmatmul.bf16.gmra.mxu0 %v386
    %v400 = vpop.f32.mrf.mxu0
    %v401 = vadd.f32 %v381, %v400
    %v402 = vpop.f32.mrf.mxu0
    %403 = vdwg.mxu0
    %v404 = vld [vmem:[%s4] sm:$0x1]
    %v406 = vperm.slane %v404, 0
    %v408 = vadd.f32 %v401, %v406
    %vm409 = vcmask 64512
    %410 = vst.msk [vmem:[#allocation10] sm:$0xff] %vm409, %v408
    // Predicated region
    $region38: #{multimodal_classifier_forward.1} parent=1 // pred_check
      _
    $region39: #{multimodal_classifier_forward.1} parent=1 // pred_check_branch
      %412 = sbr.rel (0) target = $region41
    $region40: #{multimodal_classifier_forward.1} parent=1 // pred_region
      %414 = vsyncadd [#allocation4], 0
      %s416 = sshll.u32 [#allocation10], 4
      %s417 = int_to_ptr.vmem [resolvable:$true] %s416
      %s418 = sshll.u32 %s5, 4
      %s419 = int_to_ptr.hbm [resolvable:$true] %s418
      %421 = dma.vmem_to_hbm [thread:$0]  %s417, 128, %s419, [#allocation4]
    $region41: #{multimodal_classifier_forward.1} parent=1 // pred_fallthru
      _
    // Predicated region
    $region42: #{multimodal_classifier_forward.1} parent=1 // pred_check
      _
    $region43: #{multimodal_classifier_forward.1} parent=1 // pred_check_branch
      %423 = sbr.rel (0) target = $region45
    $region44: #{multimodal_classifier_forward.1} parent=1 // pred_region
      %425 = dma.done [#allocation4], 128
    $region45: #{multimodal_classifier_forward.1} parent=1 // pred_fallthru
      _
    %426 = vsyncpa [#allocation3], 1
    %427 = vsyncpa [#allocation6], 1
    %428 = vsyncpa [#allocation9], 1
    %429 = vsyncpa [#allocation4], 1

</llo_original>
